<compile_context>
chip_gen: v5e
topology: v5e:2x2
jax: 0.10.0
libtpu: 0.0.40
codegen_flags: <defaults>
</compile_context>

<pallas_src>
import functools

import jax
import jax.numpy as jnp
from jax import lax
from jax.experimental import pallas as pl
from jax.experimental.pallas import tpu as pltpu


def _round_up(x, m):
    return ((x + m - 1) // m) * m


def _label_smoothing_kernel(pred_ref, tgt_ref, out_ref, acc_ref, *,
                            confidence, smooth_val, padding_idx, n_total):
    """Grid = (groups, row_tiles_per_group). One step handles a (TM, C) tile.

    pred_ref : (TM, C) logits tile (native dtype, cast to f32 here)
    tgt_ref  : (TM, 1) int32 target tile
    out_ref  : (1, 8, 128) f32 per-group partial-loss slab (lane-dense store)
    acc_ref  : (TM, 1) f32 running per-row loss accumulator (VMEM scratch)
    """
    i = pl.program_id(1)

    @pl.when(i == 0)
    def _():
        acc_ref[...] = jnp.zeros_like(acc_ref)

    x = pred_ref[...].astype(jnp.float32)                     # (TM, C)
    tm, c = x.shape

    # log_softmax along the class axis
    m = jnp.max(x, axis=-1, keepdims=True)
    z = x - m
    lse = jnp.log(jnp.sum(jnp.exp(z), axis=-1, keepdims=True))
    logp = z - lse                                            # (TM, C)

    tgt = tgt_ref[...]                                        # (TM, 1) int32
    col = lax.broadcasted_iota(jnp.int32, (tm, c), 1)

    # Closed form of sum_c(-true_dist * logp):
    #   true_dist = smooth_val everywhere, confidence at the target column,
    #               0 at the padding column, whole row zeroed if target == pad.
    logp_tgt = jnp.sum(jnp.where(col == tgt, logp, 0.0), axis=-1, keepdims=True)
    logp_pad = logp[:, padding_idx:padding_idx + 1]
    row_sum = jnp.sum(logp, axis=-1, keepdims=True)
    row_keep = (tgt != padding_idx).astype(jnp.float32)
    row_loss = -(confidence * logp_tgt
                 + smooth_val * (row_sum - logp_tgt - logp_pad))
    acc_ref[...] += row_keep * row_loss

    @pl.when(i == pl.num_programs(1) - 1)
    def _():
        group_sum = jnp.sum(acc_ref[...])
        out_ref[...] = jnp.full(out_ref.shape, group_sum / n_total, jnp.float32)


def label_smoothing_loss(pred, target, *, classes, padding_idx, smoothing=0.0,
                         block_rows=None, num_groups=2,
                         vmem_limit_bytes=40 * 1024 * 1024):
    """Pallas implementation of LabelSmoothingLoss.forward.

    pred   : (N, C) float logits (f32 or bf16 — DMA'd in native dtype)
    target : (N,)   int class indices
    returns: scalar f32 (mean over all N rows, matching the PyTorch module)
    """
    n, c = pred.shape
    assert c == classes
    assert 0 <= padding_idx < classes
    if smoothing != 0.0:
        assert classes > 2, "smoothing/(classes-2) requires classes > 2"
    confidence = float(1.0 - smoothing)
    smooth_val = float(smoothing / (classes - 2)) if smoothing != 0.0 else 0.0

    itemsize = jnp.dtype(pred.dtype).itemsize
    row_align = 16 if itemsize == 2 else 8        # bf16 packs 16 rows / vreg

    # Split rows over groups: 'parallel' megacore axis on v7x, harmless on 1-TC chips.
    g = int(min(num_groups, max(1, n // row_align)))
    rows_per_group = _round_up(-(-n // g), row_align)

    if block_rows is None:
        # Largest row tile whose pred buffer stays <= ~8 MiB so it double-buffers
        # comfortably under the explicit VMEM limit (incl. v7x's 64 MiB VMEM).
        per_buf_budget = 8 * 1024 * 1024
        tm = max(per_buf_budget // max(c * itemsize, 1), row_align)
        tm = min((tm // row_align) * row_align, 1024)
        block_rows = max(min(tm, rows_per_group), row_align)
    block_rows = _round_up(int(block_rows), row_align)

    rows_per_group = _round_up(rows_per_group, block_rows)
    steps = rows_per_group // block_rows
    n_pad = g * rows_per_group

    if n_pad != n:
        # Padding rows get target == padding_idx, so they contribute exactly 0.
        pred = jnp.pad(pred, ((0, n_pad - n), (0, 0)))
        target = jnp.pad(target, (0, n_pad - n), constant_values=padding_idx)
    tgt2d = target.astype(jnp.int32).reshape(n_pad, 1)

    kernel = functools.partial(
        _label_smoothing_kernel,
        confidence=confidence,            # plain Python scalars -> immediates
        smooth_val=smooth_val,
        padding_idx=int(padding_idx),
        n_total=int(n),                   # mean over original N (incl. pad rows),
    )                                     # matching the PyTorch reference.

    partials = pl.pallas_call(
        kernel,
        out_shape=jax.ShapeDtypeStruct((g, 8, 128), jnp.float32),
        grid_spec=pltpu.PrefetchScalarGridSpec(
            num_scalar_prefetch=0,
            grid=(g, steps),
            in_specs=[
                pl.BlockSpec((block_rows, c),
                             lambda grp, i: (grp * steps + i, 0)),
                pl.BlockSpec((block_rows, 1),
                             lambda grp, i: (grp * steps + i, 0)),
            ],
            out_specs=pl.BlockSpec((1, 8, 128), lambda grp, i: (grp, 0, 0)),
            scratch_shapes=[pltpu.VMEM((block_rows, 1), jnp.float32)],
        ),
        compiler_params=pltpu.CompilerParams(
            dimension_semantics=("parallel", "arbitrary"),
            vmem_limit_bytes=vmem_limit_bytes,
        ),
    )(pred, tgt2d)
    # Each group wrote group_sum / N; the total loss is the sum of the groups.
    return jnp.sum(partials[:, 0, 0])


def _reference(pred, target, *, classes, padding_idx, smoothing):
    """Pure-JAX reference mirroring the PyTorch module."""
    pred = jax.nn.log_softmax(pred.astype(jnp.float32), axis=-1)
    n, c = pred.shape
    confidence = 1.0 - smoothing
    smooth_val = smoothing / (classes - 2) if smoothing != 0.0 else 0.0
    true_dist = jnp.full((n, c), smooth_val, jnp.float32)
    true_dist = true_dist.at[jnp.arange(n), target].set(confidence)
    true_dist = true_dist.at[:, padding_idx].set(0.0)
    true_dist = jnp.where((target == padding_idx)[:, None], 0.0, true_dist)
    return jnp.mean(jnp.sum(-true_dist * pred, axis=-1))


if __name__ == "__main__":
    key = jax.random.PRNGKey(0)

    def run_case(n, c, dtype, padding_idx=0, smoothing=0.1, block_rows=None,
                 seed_off=0):
        k1, k2 = jax.random.split(jax.random.fold_in(key, seed_off))
        pred = jax.random.normal(k1, (n, c), dtype=jnp.float32).astype(dtype)
        target = jax.random.randint(k2, (n,), 0, c, dtype=jnp.int32)
        # force some padding positions to exercise the row-mask path
        target = target.at[min(3, n - 1)].set(padding_idx)
        target = target.at[n - 1].set(padding_idx)

        loss = label_smoothing_loss(pred, target, classes=c,
                                    padding_idx=padding_idx,
                                    smoothing=smoothing,
                                    block_rows=block_rows)
        loss = jax.block_until_ready(loss)
        ref = _reference(pred, target, classes=c, padding_idx=padding_idx,
                         smoothing=smoothing)
        assert jnp.allclose(loss, ref, atol=1e-4, rtol=1e-5), \
            (dtype, n, c, loss, ref)

    # f32, N=16: exercises the 2-group 'parallel' axis
    run_case(16, 32, jnp.float32, seed_off=0)
    # bf16, N not a multiple of the 16-row bf16 tile: exercises the padding path
    run_case(20, 40, jnp.bfloat16, seed_off=1)
    # multiple reduction steps per group (explicit small block_rows)
    run_case(64, 128, jnp.float32, block_rows=16, seed_off=2)

    print("KERNEL_OK")
</pallas_src>

<mosaic_0001>
module attributes {stable_mosaic.version = 11 : i64} {
  func.func @_label_smoothing_kernel(%arg0: i32, %arg1: i32, %arg2: memref<8x32xf32, #tpu.memory_space<vmem>>, %arg3: memref<8x1xi32, #tpu.memory_space<vmem>>, %arg4: memref<1x8x128xf32, #tpu.memory_space<vmem>>, %arg5: memref<8x1xf32, #tpu.memory_space<vmem>>) attributes {dimension_semantics = [#tpu.dimension_semantics<parallel>, #tpu.dimension_semantics<arbitrary>], iteration_bounds = array<i64: 2, 1>, scalar_prefetch = 0 : i64, scratch_operands = 1 : i64, tpu.core_type = #tpu.core_type<tc>, window_params = [{transform_indices = @transform_0, window_bounds = array<i64: 8, 32>}, {transform_indices = @transform_1, window_bounds = array<i64: 8, 1>}, {transform_indices = @transform_2, window_bounds = array<i64: 1, 8, 128>}]} {
    %c0_i32 = arith.constant 0 : i32
    %0 = arith.cmpi eq, %arg1, %c0_i32 : i32
    %1 = arith.extui %0 : i1 to i32
    %c0_i32_0 = arith.constant 0 : i32
    %2 = arith.cmpi ne, %1, %c0_i32_0 : i32
    scf.if %2 {
      %cst_18 = arith.constant 0.000000e+00 : f32
      %45 = vector.broadcast %cst_18 : f32 to vector<8x1xf32>
      %c0_19 = arith.constant 0 : index
      %c0_20 = arith.constant 0 : index
      %46 = vector.load %arg5[%c0_19, %c0_20] : memref<8x1xf32, #tpu.memory_space<vmem>>, vector<8x1xf32>
      tpu.vector_store %arg5[%c0_19, %c0_20], %45 {strides = array<i32>} : memref<8x1xf32, #tpu.memory_space<vmem>>, vector<8x1xf32>,
    } else {
    }
    %c0 = arith.constant 0 : index
    %c0_1 = arith.constant 0 : index
    %3 = vector.load %arg2[%c0, %c0_1] : memref<8x32xf32, #tpu.memory_space<vmem>>, vector<8x32xf32>
    %cst = arith.constant dense<0xFF800000> : vector<8xf32>
    %4 = vector.multi_reduction <maximumf>, %3, %cst [1] : vector<8x32xf32> to vector<8xf32>
    %5 = vector.shape_cast %4 : vector<8xf32> to vector<8x1xf32>
    %6 = vector.broadcast %5 : vector<8x1xf32> to vector<8x32xf32>
    %7 = arith.subf %3, %6 : vector<8x32xf32>
    %8 = math.exp %7 : vector<8x32xf32>
    %cst_2 = arith.constant dense<0.000000e+00> : vector<8xf32>
    %9 = vector.multi_reduction <add>, %8, %cst_2 [1] : vector<8x32xf32> to vector<8xf32>
    %10 = vector.shape_cast %9 : vector<8xf32> to vector<8x1xf32>
    %11 = math.log %10 : vector<8x1xf32>
    %12 = vector.broadcast %11 : vector<8x1xf32> to vector<8x32xf32>
    %13 = arith.subf %7, %12 : vector<8x32xf32>
    %c0_3 = arith.constant 0 : index
    %c0_4 = arith.constant 0 : index
    %14 = vector.load %arg3[%c0_3, %c0_4] : memref<8x1xi32, #tpu.memory_space<vmem>>, vector<8x1xi32>
    %15 = tpu.iota {dimensions = array<i32: 1>} : vector<8x32xi32>
    %16 = vector.broadcast %14 : vector<8x1xi32> to vector<8x32xi32>
    %17 = arith.cmpi eq, %15, %16 : vector<8x32xi32>
    %cst_5 = arith.constant 0.000000e+00 : f32
    %18 = vector.broadcast %cst_5 : f32 to vector<8x32xf32>
    %19 = arith.select %17, %13, %18 : vector<8x32xi1>, vector<8x32xf32>
    %cst_6 = arith.constant dense<0.000000e+00> : vector<8xf32>
    %20 = vector.multi_reduction <add>, %19, %cst_6 [1] : vector<8x32xf32> to vector<8xf32>
    %21 = vector.shape_cast %20 : vector<8xf32> to vector<8x1xf32>
    %22 = vector.extract_strided_slice %13 {offsets = [0, 0], sizes = [8, 1], strides = [1, 1]} : vector<8x32xf32> to vector<8x1xf32>
    %cst_7 = arith.constant dense<0.000000e+00> : vector<8xf32>
    %23 = vector.multi_reduction <add>, %13, %cst_7 [1] : vector<8x32xf32> to vector<8xf32>
    %24 = vector.shape_cast %23 : vector<8xf32> to vector<8x1xf32>
    %c0_i32_8 = arith.constant 0 : i32
    %25 = vector.broadcast %c0_i32_8 : i32 to vector<8x1xi32>
    %26 = arith.cmpi ne, %14, %25 : vector<8x1xi32>
    %27 = arith.extui %26 : vector<8x1xi1> to vector<8x1xi32>
    %28 = arith.sitofp %27 : vector<8x1xi32> to vector<8x1xf32>
    %cst_9 = arith.constant 0.899999976 : f32
    %29 = vector.broadcast %cst_9 : f32 to vector<8x1xf32>
    %30 = arith.mulf %29, %21 : vector<8x1xf32>
    %31 = arith.subf %24, %21 : vector<8x1xf32>
    %32 = arith.subf %31, %22 : vector<8x1xf32>
    %cst_10 = arith.constant 0.00333333341 : f32
    %33 = vector.broadcast %cst_10 : f32 to vector<8x1xf32>
    %34 = arith.mulf %33, %32 : vector<8x1xf32>
    %35 = arith.addf %30, %34 : vector<8x1xf32>
    %cst_11 = arith.constant 0.000000e+00 : f32
    %36 = vector.broadcast %cst_11 : f32 to vector<8x1xf32>
    %37 = arith.subf %36, %35 : vector<8x1xf32>
    %c0_12 = arith.constant 0 : index
    %c0_13 = arith.constant 0 : index
    %38 = vector.load %arg5[%c0_12, %c0_13] : memref<8x1xf32, #tpu.memory_space<vmem>>, vector<8x1xf32>
    %39 = arith.mulf %28, %37 : vector<8x1xf32>
    %40 = arith.addf %38, %39 : vector<8x1xf32>
    %c0_14 = arith.constant 0 : index
    %c0_15 = arith.constant 0 : index
    %41 = vector.load %arg5[%c0_14, %c0_15] : memref<8x1xf32, #tpu.memory_space<vmem>>, vector<8x1xf32>
    tpu.vector_store %arg5[%c0_14, %c0_15], %40 {strides = array<i32>} : memref<8x1xf32, #tpu.memory_space<vmem>>, vector<8x1xf32>,
    %c0_i32_16 = arith.constant 0 : i32
    %42 = arith.cmpi eq, %arg1, %c0_i32_16 : i32
    %43 = arith.extui %42 : i1 to i32
    %c0_i32_17 = arith.constant 0 : i32
    %44 = arith.cmpi ne, %43, %c0_i32_17 : i32
    scf.if %44 {
      %c0_18 = arith.constant 0 : index
      %c0_19 = arith.constant 0 : index
      %45 = vector.load %arg5[%c0_18, %c0_19] : memref<8x1xf32, #tpu.memory_space<vmem>>, vector<8x1xf32>
      %46 = vector.shape_cast %45 : vector<8x1xf32> to vector<1x8x1xf32>
      %cst_20 = arith.constant dense<0.000000e+00> : vector<1xf32>
      %47 = vector.multi_reduction <add>, %46, %cst_20 [1, 2] : vector<1x8x1xf32> to vector<1xf32>
      %48 = vector.shape_cast %47 : vector<1xf32> to vector<1x1x1xf32>
      %49 = vector.extract %48[0, 0, 0] : f32 from vector<1x1x1xf32>
      %cst_21 = arith.constant 1.600000e+01 : f32
      %50 = arith.divf %49, %cst_21 : f32
      %51 = vector.broadcast %50 : f32 to vector<1x8x128xf32>
      %c0_22 = arith.constant 0 : index
      %c0_23 = arith.constant 0 : index
      %c0_24 = arith.constant 0 : index
      %52 = vector.load %arg4[%c0_22, %c0_23, %c0_24] : memref<1x8x128xf32, #tpu.memory_space<vmem>>, vector<1x8x128xf32>
      tpu.vector_store %arg4[%c0_22, %c0_23, %c0_24], %51 {strides = array<i32>} : memref<1x8x128xf32, #tpu.memory_space<vmem>>, vector<1x8x128xf32>,
    } else {
    }
    return
  }
  func.func @transform_0(%arg0: i32, %arg1: i32) -> (i32, i32) {
    %c1_i32 = arith.constant 1 : i32
    %0 = arith.muli %arg0, %c1_i32 : i32
    %1 = arith.addi %0, %arg1 : i32
    %c0_i32 = arith.constant 0 : i32
    %c0_i32_0 = arith.constant 0 : i32
    return %1, %c0_i32 : i32, i32
  }
  func.func @transform_1(%arg0: i32, %arg1: i32) -> (i32, i32) {
    %c1_i32 = arith.constant 1 : i32
    %0 = arith.muli %arg0, %c1_i32 : i32
    %1 = arith.addi %0, %arg1 : i32
    %c0_i32 = arith.constant 0 : i32
    %c0_i32_0 = arith.constant 0 : i32
    return %1, %c0_i32 : i32, i32
  }
  func.func @transform_2(%arg0: i32, %arg1: i32) -> (i32, i32, i32) {
    %c0_i32 = arith.constant 0 : i32
    %c0_i32_0 = arith.constant 0 : i32
    %c0_i32_1 = arith.constant 0 : i32
    return %arg0, %c0_i32, %c0_i32_0 : i32, i32, i32
  }
}

</mosaic_0001>

<llo_original>
// kernel: tpu_custom_call.1
$region0: #{tpu_custom_call.1}
  #allocation0 [shape = 'u32[]', space=smem, size = 0x4, offset = 0x4, fixed_abs, tag = 'smem constant byte address 0x4 - core index']
  #allocation1 [shape = 'u32[72,128]{1,0:T(1,128)}', space=vmem, size = 0x9000, scoped, tag = 'internal scratch']
  #allocation2 [shape = 'f32[8,1]{1,0:T(8,128)}', space=vmem, size = 0x1000, scoped, tag = 'scratch operand']
  %s0 = inlined_call_operand.vmem [shape: f32[16,32], index: 0, kind: input, shape index: {}]
  %s1 = inlined_call_operand.vmem [shape: s32[16,1], index: 1, kind: input, shape index: {}]
  %s2 = inlined_call_operand.hbm [shape: f32[2,8,128], index: 2, kind: output, shape index: {}]
  %s3 = sld [smem:[#allocation0]]
  $region49: #{tpu_custom_call.1} parent=0
    _
  %s5 = ssub.s32 1, %s3
  %s6 = scalar_select 0, %s5, %s3
  $region1: #{tpu_custom_call.1} parent=0
    #allocation3 [shape = 'u8[8192]{0}', space=vmem, size = 0x2000, scoped, tag = 'output window, operand 0']
    #allocation4 [shape = 's32[2]{0}', space=sflag, size = 0x8, scoped, tag = 'scoped memory for tpu_custom_call.1']
    %7 = vsyncpa [#allocation4], 0
    %s8 = scalar_lea.sflag [#allocation4], 1
    %9 = vsyncpa %s8, 0
    loop: start=0, step=1, limit=4
    $region2: #{tpu_custom_call.1} parent=1 // loop_pre_header
      _
    $region3: #{tpu_custom_call.1} parent=1 // loop_header
      %s11 = sphi 0, %s15
      %p12 = scmp.ge.s32.totalorder %s11, 4
      %s18 = sphi 0, %s30
      %s19 = sphi 0, %s26
      %s20 = sphi 0, %s18
      %s21 = sphi 0, %s19
      %s22 = sphi 0, %s20
      %s23 = sphi 0, %s21
      %s35 = sphi 0, %s37
      %s38 = sphi 0, %s35
      %s39 = sphi 0, %s38
      %s55 = sphi 0, %s39
      %s63 = sphi 0, %s65
      %s66 = sphi 0, %s63
      %s67 = sphi 0, %s66
      %s83 = sphi 0, %s67
      %s89 = sphi 0, %s91
      %s92 = sphi 0, %s89
      %s93 = sphi 0, %s92
      %s109 = sphi 0, %s93
    $region4: #{tpu_custom_call.1} parent=1 // loop_header_branch
      %14 = sbr.rel (%p12) target = $region8
    $region5: #{tpu_custom_call.1} parent=1 // loop_body
      %s16 = ssub.s32 %s11, 1
      %s17 = ssub.s32 %s11, 2
      %s24 = sadd.s32 1, %s19
      %p25 = scmp.ge.s32.totalorder %s24, 1
      %s26 = scalar_select %p25, 0, %s24
      %s27 = sadd.s32 1, %s18
      %s28 = scalar_select %p25, %s27, %s18
      %p29 = scmp.ge.s32.totalorder %s28, 2
      %s30 = scalar_select %p29, 0, %s28
      %s31 = sadd.s32 %s18, %s19
      %s32 = sadd.s32 %s30, %s26
      %s33 = ssub.s32 %s31, %s32
      %p34 = scmp.eq.s32.totalorder %s33, 0
      %s36 = sadd.s32 %s35, 1
      %s37 = scalar_select %p34, %s35, %s36
      %p40 = pneg %p34
      %p41 = scmp.eq.s32.totalorder %s11, 1
      %p42 = por %p40, %p41
      %p43 = scmp.ne.s32.totalorder %s35, %s38
      %p44 = scmp.eq.s32.totalorder %s11, 0
      %p45 = por %p43, %p44
      %p46 = scmp.ne.s32.totalorder %s35, %s38
      %p47 = scmp.eq.s32.totalorder %s16, 1
      %p48 = por %p46, %p47
      %p49 = scmp.ne.s32.totalorder %s38, %s39
      %p50 = scmp.eq.s32.totalorder %s16, 0
      %p51 = por %p49, %p50
      %p52 = scmp.ne.s32.totalorder %s38, %s39
      %p53 = scmp.eq.s32.totalorder %s17, 1
      %p54 = por %p52, %p53
      %p56 = scmp.ne.s32.totalorder %s39, %s55
      %p57 = scmp.eq.s32.totalorder %s17, 0
      %p58 = por %p56, %p57
      %s59 = sadd.s32 %s18, %s19
      %s60 = sadd.s32 %s30, %s26
      %s61 = ssub.s32 %s59, %s60
      %p62 = scmp.eq.s32.totalorder %s61, 0
      %s64 = sadd.s32 %s63, 1
      %s65 = scalar_select %p62, %s63, %s64
      %p68 = pneg %p62
      %p69 = scmp.eq.s32.totalorder %s11, 1
      %p70 = por %p68, %p69
      %p71 = scmp.ne.s32.totalorder %s63, %s66
      %p72 = scmp.eq.s32.totalorder %s11, 0
      %p73 = por %p71, %p72
      %p74 = scmp.ne.s32.totalorder %s63, %s66
      %p75 = scmp.eq.s32.totalorder %s16, 1
      %p76 = por %p74, %p75
      %p77 = scmp.ne.s32.totalorder %s66, %s67
      %p78 = scmp.eq.s32.totalorder %s16, 0
      %p79 = por %p77, %p78
      %p80 = scmp.ne.s32.totalorder %s66, %s67
      %p81 = scmp.eq.s32.totalorder %s17, 1
      %p82 = por %p80, %p81
      %p84 = scmp.ne.s32.totalorder %s67, %s83
      %p85 = scmp.eq.s32.totalorder %s17, 0
      %p86 = por %p84, %p85
      %s87 = ssub.s32 %s18, %s30
      %p88 = scmp.eq.s32.totalorder %s87, 0
      %s90 = sadd.s32 %s89, 1
      %s91 = scalar_select %p88, %s89, %s90
      %p94 = pneg %p88
      %p95 = scmp.eq.s32.totalorder %s11, 1
      %p96 = por %p94, %p95
      %p97 = scmp.ne.s32.totalorder %s89, %s92
      %p98 = scmp.eq.s32.totalorder %s11, 0
      %p99 = por %p97, %p98
      %p100 = scmp.ne.s32.totalorder %s89, %s92
      %p101 = scmp.eq.s32.totalorder %s16, 1
      %p102 = por %p100, %p101
      %p103 = scmp.ne.s32.totalorder %s92, %s93
      %p104 = scmp.eq.s32.totalorder %s16, 0
      %p105 = por %p103, %p104
      %p106 = scmp.ne.s32.totalorder %s92, %s93
      %p107 = scmp.eq.s32.totalorder %s17, 1
      %p108 = por %p106, %p107
      %p110 = scmp.ne.s32.totalorder %s93, %s109
      %p111 = scmp.eq.s32.totalorder %s17, 0
      %p112 = por %p110, %p111
      %p113 = scmp.le.s32.totalorder 1, %s11
      %p114 = scmp.lt.s32.totalorder %s11, 3
      %p115 = pnand %p113, %p114
      %p116 = pneg %p115
      // Predicated region
      $region9: #{tpu_custom_call.1} parent=5 // pred_check
        _
      $region10: #{tpu_custom_call.1} parent=5 // pred_check_branch
        %118 = sbr.rel (%p115) target = $region12
      $region11: #{tpu_custom_call.1} parent=5 // pred_region
        %s119 = ssub.s32 %s11, 1
      $region12: #{tpu_custom_call.1} parent=5 // pred_fallthru
        _
      %p120 = scmp.lt.s32.totalorder %s11, 2
      // Predicated region
      $region13: #{tpu_custom_call.1} parent=5 // pred_check
        %p121 = pneg %p120
      $region14: #{tpu_custom_call.1} parent=5 // pred_check_branch
        %123 = sbr.rel (%p121) target = $region16
      $region15: #{tpu_custom_call.1} parent=5 // pred_region
        // Predicated region
        $region17: #{tpu_custom_call.1} parent=15 // pred_check
          %p124 = pneg %p45
        $region18: #{tpu_custom_call.1} parent=15 // pred_check_branch
          %126 = sbr.rel (%p124) target = $region20
        $region19: #{tpu_custom_call.1} parent=15 // pred_region
          %s127 = sadd.s32 %s18, %s19
          %p128 = scmp.lt.s32.totalorder %s127, 1
          %s129 = scalar_select %p128, %s127, 1
          %s130 = smul.addr %s129, 8
          %s131 = scalar_lea.vmem %s0, %s130
          %s132 = sadd.s32 %s18, %s19
        $region20: #{tpu_custom_call.1} parent=15 // pred_fallthru
          _
        // Predicated region
        $region21: #{tpu_custom_call.1} parent=15 // pred_check
          %p133 = pneg %p73
        $region22: #{tpu_custom_call.1} parent=15 // pred_check_branch
          %135 = sbr.rel (%p133) target = $region24
        $region23: #{tpu_custom_call.1} parent=15 // pred_region
          %s136 = sadd.s32 %s18, %s19
          %p137 = scmp.lt.s32.totalorder %s136, 1
          %s138 = scalar_select %p137, %s136, 1
          %s139 = smul.addr %s138, 8
          %s140 = scalar_lea.vmem %s1, %s139
          %s141 = sadd.s32 %s18, %s19
        $region24: #{tpu_custom_call.1} parent=15 // pred_fallthru
          _
      $region16: #{tpu_custom_call.1} parent=5 // pred_fallthru
        _
      %p142 = scmp.le.s32.totalorder 1, %s11
      %p143 = scmp.lt.s32.totalorder %s11, 3
      %p144 = pnand %p142, %p143
      %p145 = pneg %p144
      // Predicated region
      $region25: #{tpu_custom_call.1} parent=5 // pred_check
        _
      $region26: #{tpu_custom_call.1} parent=5 // pred_check_branch
        %147 = sbr.rel (%p144) target = $region28
      $region27: #{tpu_custom_call.1} parent=5 // pred_region
        %s148 = ssub.s32 %s11, 1
        %s149 = sadd.s32 %s20, %s21
        %p150 = scmp.lt.s32.totalorder %s149, 1
        %s151 = scalar_select %p150, %s149, 1
        %s152 = smul.addr %s151, 8
        %s153 = scalar_lea.vmem %s0, %s152
        %p154 = pneg %p51
        %p155 = pneg %p48
        %s156 = sadd.s32 %s20, %s21
        %p157 = scmp.lt.s32.totalorder %s156, 1
        %s158 = scalar_select %p157, %s156, 1
        %s159 = smul.addr %s158, 8
        %s160 = scalar_lea.vmem %s1, %s159
        %p161 = pneg %p79
        %p162 = pneg %p76
        %p163 = pneg %p105
        %p164 = pneg %p102
        %s165 = sand.u32 %s92, 1
        %s166 = scalar_lea.sflag [#allocation4], %s165
        %s167 = sand.u32 %s92, 1
        %s168 = smul.addr %s167, 8
        %s169 = scalar_lea.vmem [#allocation3], %s168
        %s170 = sadd.s32 %s20, %s21
        %p171 = scmp.lt.s32.totalorder %s170, 1
        %s172 = scalar_select %p171, %s170, 1
        %s173 = smul.addr %s172, 8
        %s174 = scalar_lea.vmem %s0, %s173
        %s175 = sadd.s32 %s20, %s21
        %s176 = sadd.s32 %s20, %s21
        %p177 = scmp.lt.s32.totalorder %s176, 1
        %s178 = scalar_select %p177, %s176, 1
        %s179 = smul.addr %s178, 8
        %s180 = scalar_lea.vmem %s1, %s179
        %s181 = sadd.s32 %s20, %s21
        %p182 = scmp.eq.s32.totalorder %s21, 0
        // Predicated region
        $region29: #{tpu_custom_call.1} parent=27 // pred_check
          %p183 = pneg %p182
        $region30: #{tpu_custom_call.1} parent=27 // pred_check_branch
          %185 = sbr.rel (%p183) target = $region32
        $region31: #{tpu_custom_call.1} parent=27 // pred_region
          %vm186 = vcmask 7168
          %187 = vst.msk [vmem:[#allocation2] sm:$0xff] %vm186, 0.0
        $region32: #{tpu_custom_call.1} parent=27 // pred_fallthru
          _
        %v188 = vld [vmem:[%s174] sm:$0xff]
        %vm189 = vcmask 261120
        %v190 = vsel %vm189, %v188, -inf
        %191 = vmax.xlane.f32.xlu0 %v190
        %v192 = vpop.xlane.xlu0 %191
        %v193 = vsub.f32 %v188, %v192
        %v194 = vmul.f32 %v193, 1.442695
        %v195 = vpow.pop %v194
        %v196 = vsel %vm189, %v195, 0.0
        %197 = vadd.xlane.f32.xlu0 %v196
        %v198 = vpop.xlane.xlu0 %197
        %v199 = vlog2.pop %v198
        %v200 = vmul.f32 %v199, 0.6931472
        %v201 = vsub.f32 %v193, %v200
        %v202 = vld [vmem:[%s180] sm:$0xff]
        %v203 = vlaneseq
        %v204 = vand.u32 %v203, 127
        %205 = vset.pattern.permute.xlu0 0
        %206 = vperm.xlu0 %205, %v202
        %v207 = vpop.permute.xlu0 %206
        %vm208 = vcmp.eq.s32.totalorder %v204, %v207
        %v209 = vsel %vm208, %v201, 0.0
        %v210 = vsel %vm189, %v209, 0.0
        %211 = vadd.xlane.f32.xlu0 %v210
        %v212 = vpop.xlane.xlu0 %211
        %v213 = vsel %vm189, %v201, 0.0
        %214 = vadd.xlane.f32.xlu0 %v213
        %v215 = vpop.xlane.xlu0 %214
        %vm216 = vcmp.ne.s32.totalorder %v202, 0
        %v217 = vsel %vm216, 1, 0
        %v218 = vcvt.s32.f32 %v217
        %v219 = vmul.f32 %v212, 0.9
        %v220 = vsub.f32 %v215, %v212
        %v221 = vsub.f32 %v220, %v201
        %v222 = vmul.f32 %v221, 0.0033333334
        %v223 = vadd.f32 %v219, %v222
        %v224 = vsub.f32 0.0, %v223
        %v225 = vld [vmem:[#allocation2] sm:$0xff]
        %v226 = vmul.f32 %v218, %v224
        %v227 = vadd.f32 %v225, %v226
        %vm228 = vcmask 7168
        %229 = vst.msk [vmem:[#allocation2] sm:$0xff] %vm228, %v227
        // Predicated region
        $region33: #{tpu_custom_call.1} parent=27 // pred_check
          %p230 = pneg %p182
        $region34: #{tpu_custom_call.1} parent=27 // pred_check_branch
          %232 = sbr.rel (%p230) target = $region36
        $region35: #{tpu_custom_call.1} parent=27 // pred_region
          %v233 = vld [vmem:[#allocation2] sm:$0xff]
          %v234 = vsel %vm228, %v233, 0.0
          %235 = vadd.xlane.f32.xlu0 %v234
          %v236 = vpop.xlane.xlu0 %235
          %v237 = vrot.slane %v236, 4
          %v238 = vadd.f32 %v236, %v237
          %v239 = vrot.slane %v238, 2
          %v240 = vadd.f32 %v238, %v239
          %v241 = vrot.slane %v240, 1
          %v242 = vadd.f32 %v240, %v241
          %s243 = vtos %v242
          %v244 = vrcp.pop 16.0
          %v245 = vmul.f32 16.0, %v244
          %v246 = vsub.f32 1.0, %v245
          %v247 = vmul.f32 %v244, %v246
          %v248 = vadd.f32 %v244, %v247
          %vm249 = vweird.f32 %v244
          %v250 = vsel %vm249, %v244, %v248
          %s251 = vtos %v250
          %s252 = smul.f32 %s243, %s251
          %v253 = vstv %s252
          %254 = vst [vmem:[%s169] sm:$0xff] %v253
        $region36: #{tpu_custom_call.1} parent=27 // pred_fallthru
          _
        %s255 = sand.u32 %s92, 1
        %s256 = scalar_lea.sflag [#allocation4], %s255
        %s257 = sand.u32 %s92, 1
        %s258 = smul.addr %s257, 8
        %s259 = scalar_lea.vmem [#allocation3], %s258
        // Predicated region
        $region37: #{tpu_custom_call.1} parent=27 // pred_check
          %p260 = pneg %p102
        $region38: #{tpu_custom_call.1} parent=27 // pred_check_branch
          %262 = sbr.rel (%p260) target = $region40
        $region39: #{tpu_custom_call.1} parent=27 // pred_region
          %264 = vsyncadd %s256, 0
          %s265 = smul.addr %s20, 8
          %s266 = scalar_lea.hbm %s2, %s265
          %s268 = sshll.u32 %s259, 4
          %s269 = int_to_ptr.vmem [resolvable:$true] %s268
          %s270 = sshll.u32 %s266, 4
          %s271 = int_to_ptr.hbm [resolvable:$true] %s270
          %273 = dma.vmem_to_hbm [thread:$0]  %s269, 128, %s271, %s256
        $region40: #{tpu_custom_call.1} parent=27 // pred_fallthru
          _
      $region28: #{tpu_custom_call.1} parent=5 // pred_fallthru
        _
      %p274 = scmp.le.s32.totalorder 2, %s11
      // Predicated region
      $region41: #{tpu_custom_call.1} parent=5 // pred_check
        %p275 = pneg %p274
      $region42: #{tpu_custom_call.1} parent=5 // pred_check_branch
        %277 = sbr.rel (%p275) target = $region44
      $region43: #{tpu_custom_call.1} parent=5 // pred_region
        %s278 = ssub.s32 %s11, 2
        // Predicated region
        $region45: #{tpu_custom_call.1} parent=43 // pred_check
          %p279 = pneg %p108
        $region46: #{tpu_custom_call.1} parent=43 // pred_check_branch
          %281 = sbr.rel (%p279) target = $region48
        $region47: #{tpu_custom_call.1} parent=43 // pred_region
          %s282 = sand.u32 %s93, 1
          %s283 = scalar_lea.sflag [#allocation4], %s282
          %s284 = sand.u32 %s93, 1
          %s285 = smul.addr %s284, 8
          %s286 = scalar_lea.vmem [#allocation3], %s285
          %288 = dma.done %s283, 128
        $region48: #{tpu_custom_call.1} parent=43 // pred_fallthru
          _
      $region44: #{tpu_custom_call.1} parent=5 // pred_fallthru
        _
    $region6: #{tpu_custom_call.1} parent=1 // loop_footer
      %s15 = sadd.s32 1, %s11
    $region7: #{tpu_custom_call.1} parent=1 // loop_footer_branch
      %10 = sbr.rel target = $region3
    $region8: #{tpu_custom_call.1} parent=1 // loop_exit
      _
    %289 = vsyncpa [#allocation4], 1
    %s290 = scalar_lea.sflag [#allocation4], 1
    %291 = vsyncpa %s290, 1

</llo_original>
